<compile_context>
chip_gen: v6e
topology: v6e:2x2x1
jax: 0.10.0
libtpu: 0.0.40
codegen_flags: <defaults>
</compile_context>

<pallas_src>
import functools
import math

import jax
import jax.numpy as jnp
from jax import lax
from jax.experimental import pallas as pl
from jax.experimental.pallas import tpu as pltpu


def conv2d_out_dim(dim, kernel_size, padding=0, stride=1, dilation=1, ceil_mode=False):
    if ceil_mode:
        return int(math.ceil((dim + 2 * padding - dilation * (kernel_size - 1) - 1) / stride + 1))
    return int(math.floor((dim + 2 * padding - dilation * (kernel_size - 1) - 1) / stride + 1))


# ------------------------------ Pallas kernel --------------------------------

def _fused_block_kernel(xp_ref, b1_ref, b2_ref, s1_ref, o1_ref, s2_ref, o2_ref,
                        ms_ref, out_ref, mid_ref, *, apply_ms1):
    # xp:  (1, (H+2)*NT, W*Cin) bf16  padded input rows, (padded_row, sample)-interleaved
    # b1:  (3*W*Cin, W*C) bf16        K-concatenated banded conv1 weight (3 vertical taps)
    # b2:  (3*W*C,  W*C) bf16         K-concatenated banded conv2 weight
    # s1/o1: (1, H*NT, W*C) f32       folded BN1 scale/bias * channel-mask (per sample)
    # s2/o2: (1, W*C) f32             folded BN2 scale/bias (sample independent)
    # ms:  (1, H*NT, W*C) bf16        spatial mask expanded over channels (0/1)
    # out: (1, H*NT, W*C) f32
    # mid: ((H+2)*NT, W*C) bf16 VMEM  conv2 input with zero vertical halo rows
    M = out_ref.shape[1]                      # H * NT stacked output rows
    NT = (xp_ref.shape[1] - M) // 2           # samples per grid step
    WC = out_ref.shape[2]

    # ---- conv1: one big-M, K-concatenated banded matmul (bf16 x bf16 -> f32) ----
    a1 = jnp.concatenate(
        [xp_ref[0, dy * NT:dy * NT + M, :] for dy in range(3)], axis=-1)     # (M, 3*W*Cin)
    acc1 = jnp.dot(a1, b1_ref[...], preferred_element_type=jnp.float32)      # (M, W*C)

    ms = ms_ref[0].astype(jnp.float32)
    # folded BatchNorm1 (hard channel mask already folded into scale/bias) + ReLU
    out1 = jnp.maximum(acc1 * s1_ref[0] + o1_ref[0], 0.0)
    if apply_ms1:                                          # eval mode: * mask_s after conv1
        out1 = out1 * ms

    # ---- stage the intermediate in VMEM (bf16, cast once; zero halo rows persist) ----
    @pl.when(pl.program_id(0) == 0)
    def _():
        mid_ref[0:NT, :] = jnp.zeros((NT, WC), jnp.bfloat16)
        mid_ref[NT + M:2 * NT + M, :] = jnp.zeros((NT, WC), jnp.bfloat16)

    mid_ref[NT:NT + M, :] = out1.astype(jnp.bfloat16)

    # ---- conv2: one K-concatenated banded matmul ----
    a2 = jnp.concatenate(
        [mid_ref[dy * NT:dy * NT + M, :] for dy in range(3)], axis=-1)       # (M, 3*W*C)
    acc2 = jnp.dot(a2, b2_ref[...], preferred_element_type=jnp.float32)

    # identity residual recovered in-kernel from the middle rows of xp (no extra operand)
    res = xp_ref[0, NT:NT + M, :].astype(jnp.float32)
    out = (acc2 * s2_ref[...] + o2_ref[...]) * ms + res
    out_ref[0] = jnp.maximum(out, 0.0)                     # lane-dense (M, 128) store


def fused_basic_block(xp, b1, b2, s1, o1, s2, o2, ms, *, apply_ms1):
    G, Rin, WCin = xp.shape                   # Rin = (H+2)*NT
    _, M, WC = s1.shape                       # M = H*NT
    return pl.pallas_call(
        functools.partial(_fused_block_kernel, apply_ms1=apply_ms1),
        out_shape=jax.ShapeDtypeStruct((G, M, WC), jnp.float32),
        grid=(G,),
        in_specs=[
            pl.BlockSpec((1, Rin, WCin), lambda g: (g, 0, 0)),   # padded input rows (bf16)
            pl.BlockSpec(b1.shape, lambda g: (0, 0)),            # conv1 banded weight (resident)
            pl.BlockSpec(b2.shape, lambda g: (0, 0)),            # conv2 banded weight (resident)
            pl.BlockSpec((1, M, WC), lambda g: (g, 0, 0)),       # BN1 scale * mask_c
            pl.BlockSpec((1, M, WC), lambda g: (g, 0, 0)),       # BN1 bias  * mask_c
            pl.BlockSpec((1, WC), lambda g: (0, 0)),             # BN2 scale
            pl.BlockSpec((1, WC), lambda g: (0, 0)),             # BN2 bias
            pl.BlockSpec((1, M, WC), lambda g: (g, 0, 0)),       # spatial mask (bf16)
        ],
        out_specs=pl.BlockSpec((1, M, WC), lambda g: (g, 0, 0)),
        scratch_shapes=[pltpu.VMEM((Rin, WC), jnp.bfloat16)],
        compiler_params=pltpu.CompilerParams(
            dimension_semantics=("parallel",),
            vmem_limit_bytes=32 * 1024 * 1024,
        ),
    )(xp, b1, b2, s1, o1, s2, o2, ms)


# ------------------------- glue: weights, masks, params ----------------------

def banded_weight(w_hwio, W):
    """Expand a (3,3,Cin,Cout) conv weight into a K-concatenated banded matrix.

    For tap (dy, dx): B[dy][s*Cin + ci, w*Cout + co] = w[dy, dx, ci, co] with
    s = w + dx - 1; out-of-range taps are dropped (== horizontal zero padding).
    The three dy bands are concatenated along K, so
        out_row[h] = concat_dy(in_row[h + dy]) @ B        (in_row in padded-h coords).
    """
    Kh, Kw, Cin, Cout = w_hwio.shape
    mats = []
    for dy in range(Kh):
        B = jnp.zeros((W * Cin, W * Cout), jnp.float32)
        for dx in range(Kw):
            off = dx - 1
            eye = jnp.eye(W, W, k=-off, dtype=jnp.float32)   # eye[s, w] = 1 iff s == w + off
            B = B + jnp.kron(eye, w_hwio[dy, dx])
        mats.append(B)
    return jnp.concatenate(mats, axis=0)                     # (3*W*Cin, W*Cout)


# TODO(synk): Mask_s / Mask_c source not provided in the module; reconstructed as
# (adaptive pool -> tiny linear -> hard gate) eval-mode gating with the same
# return signature (mask, norm, norm_t).

def mask_s_forward(x_nchw, ws_w, ws_b, eta):
    N, C, H, W = x_nchw.shape
    mh, mw = math.ceil(H / eta), math.ceil(W / eta)
    pooled = x_nchw.reshape(N, C, mh, H // mh, mw, W // mw).mean(axis=(3, 5))   # (N,C,mh,mw)
    z = jnp.einsum('nchw,c->nhw', pooled, ws_w) + ws_b
    mask = (z > 0).astype(jnp.float32)[:, None]                                 # (N,1,mh,mw)
    norm = mask.sum(axis=(1, 2, 3))
    norm_t = jnp.full((N,), float(mh * mw), jnp.float32)
    return mask, norm, norm_t


def mask_c_forward(x_nchw, wc_w, wc_b):
    N = x_nchw.shape[0]
    gap = x_nchw.mean(axis=(2, 3))                                              # (N,Cin)
    z = gap @ wc_w + wc_b
    mask = (z > 0).astype(jnp.float32)                                          # (N,planes)
    norm = mask.sum(axis=1)
    norm_t = jnp.full((N,), float(wc_w.shape[1]), jnp.float32)
    return mask[:, :, None, None], norm, norm_t                                 # (N,planes,1,1)


def nearest_upsample(m, H, W):
    mh, mw = m.shape[2], m.shape[3]
    return jnp.repeat(jnp.repeat(m, H // mh, axis=2), W // mw, axis=3)


def fold_bn(gamma, beta, mean, var, eps=1e-5):
    scale = gamma / jnp.sqrt(var + eps)
    return scale, beta - mean * scale


def init_params(key, inplanes, planes, eta):
    ks = jax.random.split(key, 12)
    p = {}
    p['w1'] = jax.random.normal(ks[0], (3, 3, inplanes, planes), jnp.float32) / math.sqrt(9 * inplanes)
    p['w2'] = jax.random.normal(ks[1], (3, 3, planes, planes), jnp.float32) / math.sqrt(9 * planes)
    p['bn1_g'] = 1.0 + 0.1 * jax.random.normal(ks[2], (planes,), jnp.float32)
    p['bn1_b'] = 0.1 * jax.random.normal(ks[3], (planes,), jnp.float32)
    p['bn1_m'] = 0.1 * jax.random.normal(ks[4], (planes,), jnp.float32)
    p['bn1_v'] = 1.0 + 0.1 * jnp.abs(jax.random.normal(ks[5], (planes,), jnp.float32))
    p['bn2_g'] = 1.0 + 0.1 * jax.random.normal(ks[6], (planes,), jnp.float32)
    p['bn2_b'] = 0.1 * jax.random.normal(ks[7], (planes,), jnp.float32)
    p['bn2_m'] = 0.1 * jax.random.normal(ks[8], (planes,), jnp.float32)
    p['bn2_v'] = 1.0 + 0.1 * jnp.abs(jax.random.normal(ks[9], (planes,), jnp.float32))
    p['ws_w'] = jax.random.normal(ks[10], (inplanes,), jnp.float32)
    p['ws_b'] = jnp.float32(0.0)
    p['wc_w'] = jax.random.normal(ks[11], (inplanes, planes), jnp.float32)
    p['wc_b'] = jnp.zeros((planes,), jnp.float32)
    return p


# --------------------------- BasicBlock forward ------------------------------

def basic_block_forward(params, inp, *, inplanes, planes, eta=8, stride=1,
                        training=False, samples_per_step=None):
    x, norm_1, norm_2, flops = inp          # x is NCHW, like the PyTorch module
    assert stride == 1 and inplanes == planes, "downsample=None config (identity residual)"
    N, Cin, H0, W0 = x.shape
    C = planes
    H = conv2d_out_dim(H0, kernel_size=3, stride=stride, padding=1)
    W = conv2d_out_dim(W0, kernel_size=3, stride=stride, padding=1)

    # gating heads (glue)
    mask_s_m, norm_s, norm_s_t = mask_s_forward(x, params['ws_w'], params['ws_b'], eta)
    mask_c4, norm_c, norm_c_t = mask_c_forward(x, params['wc_w'], params['wc_b'])
    mask_s_up = nearest_upsample(mask_s_m, H, W)                       # (N,1,H,W)

    # batch tiling: NT samples stacked into the matmul M dimension per grid step
    NT = samples_per_step if samples_per_step is not None else min(N, 8)
    assert N % NT == 0
    G = N // NT

    def to_tiles(a):            # (N, R, K) -> (G, R*NT, K) with rows (r, n)-interleaved
        _, R, K = a.shape
        return a.reshape(G, NT, R, K).transpose(0, 2, 1, 3).reshape(G, R * NT, K)

    # lane-dense activation rows (w*c), vertical zero halo, bf16 for the MXU
    x_rows = jnp.transpose(x, (0, 2, 3, 1)).reshape(N, H, W * Cin)     # (N,H,W*Cin)
    xp = to_tiles(jnp.pad(x_rows, ((0, 0), (1, 1), (0, 0)))).astype(jnp.bfloat16)

    # spatial mask expanded over channels, bf16 (0/1 -> exact)
    ms = jnp.repeat(mask_s_up[:, 0, :, :, None], C, axis=-1).reshape(N, H, W * C)
    ms = to_tiles(ms).astype(jnp.bfloat16)

    # folded BN; the hard 0/1 channel mask is folded into BN1 (exact, commutes with ReLU)
    scale1, bias1 = fold_bn(params['bn1_g'], params['bn1_b'], params['bn1_m'], params['bn1_v'])
    scale2, bias2 = fold_bn(params['bn2_g'], params['bn2_b'], params['bn2_m'], params['bn2_v'])
    mc = mask_c4[:, :, 0, 0]                                           # (N,C), hard 0/1
    s1_nwc = jnp.tile(scale1[None, :] * mc, (1, W))                    # (N, W*C)
    o1_nwc = jnp.tile(bias1[None, :] * mc, (1, W))
    s1 = to_tiles(jnp.broadcast_to(s1_nwc[:, None, :], (N, H, W * C)))
    o1 = to_tiles(jnp.broadcast_to(o1_nwc[:, None, :], (N, H, W * C)))
    s2 = jnp.tile(scale2, W).reshape(1, W * C)
    o2 = jnp.tile(bias2, W).reshape(1, W * C)

    # banded, K-concatenated bf16 MXU weights (horizontal zero padding folded in)
    b1 = banded_weight(params['w1'], W).astype(jnp.bfloat16)           # (3*W*Cin, W*C)
    b2 = banded_weight(params['w2'], W).astype(jnp.bfloat16)           # (3*W*C,  W*C)

    out_flat = fused_basic_block(xp, b1, b2, s1, o1, s2, o2, ms, apply_ms1=not training)
    out = (out_flat.reshape(G, H, NT, W, C)
           .transpose(0, 2, 4, 1, 3).reshape(N, C, H, W))              # back to NCHW

    norm_1 = jnp.concatenate([norm_1, jnp.concatenate([norm_s, norm_s_t])[None]], axis=0)
    norm_2 = jnp.concatenate([norm_2, jnp.concatenate([norm_c, norm_c_t])[None]], axis=0)

    # FLOPs bookkeeping (get_flops)
    s_sum = mask_s_up.sum(axis=(1, 2, 3))
    c_sum = mask_c4.sum(axis=(1, 2, 3))
    flops_conv1 = 9.0 * s_sum * c_sum * inplanes
    flops_conv2 = 9.0 * s_sum * c_sum * planes
    flops_downsample = 0.0
    flops_blk_per = flops_conv1 + flops_conv2 + flops_downsample
    flops_full = 9.0 * H * W * planes * inplanes + 9.0 * H * W * planes * planes + flops_downsample
    # TODO(synk): Mask_s.get_flops / Mask_c.get_flops not provided; use the flops
    # of the reconstructed gating heads.
    mh, mw = mask_s_m.shape[2], mask_s_m.shape[3]
    flops_mask = float(inplanes * mh * mw + inplanes * planes)
    flops_blk = jnp.concatenate(
        [flops_blk_per, jnp.array([flops_mask], jnp.float32), jnp.array([flops_full], jnp.float32)])
    flops = jnp.concatenate([flops, flops_blk[None]], axis=0)

    return out, norm_1, norm_2, flops


# ------------------------------ reference (check) ----------------------------

def ref_forward(params, x, mask_s_up, mask_c4, training=False):
    # Mirrors the kernel's bf16 rounding points (conv inputs/weights and the
    # residual; f32 accumulation and epilogue) so the comparison can be tight.
    def conv(z, w_hwio):
        zb = z.astype(jnp.bfloat16).astype(jnp.float32)
        wb = w_hwio.astype(jnp.bfloat16).astype(jnp.float32)
        w = jnp.transpose(wb, (3, 2, 0, 1))                    # -> OIHW
        return lax.conv_general_dilated(zb, w, (1, 1), ((1, 1), (1, 1)),
                                        dimension_numbers=('NCHW', 'OIHW', 'NCHW'),
                                        precision=lax.Precision.HIGHEST)

    def bn(y, g, b, m, v):
        r = lambda a: a[None, :, None, None]
        return (y - r(m)) / jnp.sqrt(r(v) + 1e-5) * r(g) + r(b)

    out = jnp.maximum(bn(conv(x, params['w1']), params['bn1_g'], params['bn1_b'],
                         params['bn1_m'], params['bn1_v']), 0.0)
    out = out * mask_c4 * mask_s_up if not training else out * mask_c4
    out = bn(conv(out, params['w2']), params['bn2_g'], params['bn2_b'],
             params['bn2_m'], params['bn2_v'])
    out = out * mask_s_up + x.astype(jnp.bfloat16).astype(jnp.float32)   # bf16 residual (as in kernel)
    return jnp.maximum(out, 0.0)


if __name__ == "__main__":
    N, C, H, W, ETA = 2, 8, 16, 16, 8      # inplanes == planes == 8, stride=1, downsample=None
    key = jax.random.PRNGKey(0)
    kx, kp = jax.random.split(key)
    x = jax.random.normal(kx, (N, C, H, W), jnp.float32)
    params = init_params(kp, C, C, ETA)

    norm_1 = jnp.zeros((0, 2 * N), jnp.float32)
    norm_2 = jnp.zeros((0, 2 * N), jnp.float32)
    flops = jnp.zeros((0, N + 2), jnp.float32)

    out, n1, n2, fl = basic_block_forward(
        params, (x, norm_1, norm_2, flops), inplanes=C, planes=C, eta=ETA,
        stride=1, training=False)
    jax.block_until_ready(out)

    # correctness check vs plain-JAX reference (bf16-consistent, tight tolerance)
    ms_m, _, _ = mask_s_forward(x, params['ws_w'], params['ws_b'], ETA)
    mc4, _, _ = mask_c_forward(x, params['wc_w'], params['wc_b'])
    ref = ref_forward(params, x, nearest_upsample(ms_m, H, W), mc4, training=False)
    assert out.shape == (N, C, H, W)
    assert n1.shape == (1, 2 * N) and n2.shape == (1, 2 * N) and fl.shape == (1, N + 2)
    assert jnp.allclose(out, ref, atol=2e-3, rtol=2e-3), float(jnp.max(jnp.abs(out - ref)))

    print("KERNEL_OK")
</pallas_src>

<mosaic_0001>
module attributes {stable_mosaic.version = 11 : i64} {
  func.func @_fused_block_kernel(%arg0: i32, %arg1: memref<1x36x128xbf16, #tpu.memory_space<vmem>>, %arg2: memref<384x128xbf16, #tpu.memory_space<vmem>>, %arg3: memref<384x128xbf16, #tpu.memory_space<vmem>>, %arg4: memref<1x32x128xf32, #tpu.memory_space<vmem>>, %arg5: memref<1x32x128xf32, #tpu.memory_space<vmem>>, %arg6: memref<1x128xf32, #tpu.memory_space<vmem>>, %arg7: memref<1x128xf32, #tpu.memory_space<vmem>>, %arg8: memref<1x32x128xbf16, #tpu.memory_space<vmem>>, %arg9: memref<1x32x128xf32, #tpu.memory_space<vmem>>, %arg10: memref<36x128xbf16, #tpu.memory_space<vmem>>) attributes {dimension_semantics = [#tpu.dimension_semantics<parallel>], iteration_bounds = array<i64: 1>, scalar_prefetch = 0 : i64, scratch_operands = 1 : i64, tpu.core_type = #tpu.core_type<tc>, window_params = [{transform_indices = @transform_0, window_bounds = array<i64: 1, 36, 128>}, {pipeline_mode = #tpu.pipeline_mode<synchronous>, transform_indices = @transform_1, window_bounds = array<i64: 384, 128>}, {pipeline_mode = #tpu.pipeline_mode<synchronous>, transform_indices = @transform_2, window_bounds = array<i64: 384, 128>}, {transform_indices = @transform_3, window_bounds = array<i64: 1, 32, 128>}, {transform_indices = @transform_4, window_bounds = array<i64: 1, 32, 128>}, {pipeline_mode = #tpu.pipeline_mode<synchronous>, transform_indices = @transform_5, window_bounds = array<i64: 1, 128>}, {pipeline_mode = #tpu.pipeline_mode<synchronous>, transform_indices = @transform_6, window_bounds = array<i64: 1, 128>}, {transform_indices = @transform_7, window_bounds = array<i64: 1, 32, 128>}, {transform_indices = @transform_8, window_bounds = array<i64: 1, 32, 128>}]} {
    %c0 = arith.constant 0 : index
    %c0_0 = arith.constant 0 : index
    %c0_1 = arith.constant 0 : index
    %0 = vector.load %arg1[%c0, %c0_0, %c0_1] : memref<1x36x128xbf16, #tpu.memory_space<vmem>>, vector<1x32x128xbf16>
    %1 = vector.shape_cast %0 : vector<1x32x128xbf16> to vector<32x128xbf16>
    %c0_2 = arith.constant 0 : index
    %c2 = arith.constant 2 : index
    %c0_3 = arith.constant 0 : index
    %2 = vector.load %arg1[%c0_2, %c2, %c0_3] : memref<1x36x128xbf16, #tpu.memory_space<vmem>>, vector<1x32x128xbf16>
    %3 = vector.shape_cast %2 : vector<1x32x128xbf16> to vector<32x128xbf16>
    %c0_4 = arith.constant 0 : index
    %c4 = arith.constant 4 : index
    %c0_5 = arith.constant 0 : index
    %4 = vector.load %arg1[%c0_4, %c4, %c0_5] : memref<1x36x128xbf16, #tpu.memory_space<vmem>>, vector<1x32x128xbf16>
    %5 = vector.shape_cast %4 : vector<1x32x128xbf16> to vector<32x128xbf16>
    %6 = tpu.concatenate %1, %3, %5 in 1 : vector<32x128xbf16>, vector<32x128xbf16>, vector<32x128xbf16> -> vector<32x384xbf16>
    %c0_6 = arith.constant 0 : index
    %c0_7 = arith.constant 0 : index
    %7 = vector.load %arg2[%c0_6, %c0_7] : memref<384x128xbf16, #tpu.memory_space<vmem>>, vector<384x128xbf16>
    %cst = arith.constant dense<0.000000e+00> : vector<32x128xf32>
    %8 = tpu.matmul %6, %7, %cst {dimension_numbers = #tpu.dot_dimension_numbers<[1], [0], [0], [1], [0, 0, 1, 1], [], []>} : vector<32x384xbf16>, vector<384x128xbf16>, vector<32x128xf32> -> vector<32x128xf32>
    %c0_8 = arith.constant 0 : index
    %c0_9 = arith.constant 0 : index
    %c0_10 = arith.constant 0 : index
    %9 = vector.load %arg8[%c0_8, %c0_9, %c0_10] : memref<1x32x128xbf16, #tpu.memory_space<vmem>>, vector<1x32x128xbf16>
    %10 = vector.shape_cast %9 : vector<1x32x128xbf16> to vector<32x128xbf16>
    %11 = arith.extf %10 : vector<32x128xbf16> to vector<32x128xf32>
    %c0_11 = arith.constant 0 : index
    %c0_12 = arith.constant 0 : index
    %c0_13 = arith.constant 0 : index
    %12 = vector.load %arg4[%c0_11, %c0_12, %c0_13] : memref<1x32x128xf32, #tpu.memory_space<vmem>>, vector<1x32x128xf32>
    %13 = vector.shape_cast %12 : vector<1x32x128xf32> to vector<32x128xf32>
    %14 = arith.mulf %8, %13 : vector<32x128xf32>
    %c0_14 = arith.constant 0 : index
    %c0_15 = arith.constant 0 : index
    %c0_16 = arith.constant 0 : index
    %15 = vector.load %arg5[%c0_14, %c0_15, %c0_16] : memref<1x32x128xf32, #tpu.memory_space<vmem>>, vector<1x32x128xf32>
    %16 = vector.shape_cast %15 : vector<1x32x128xf32> to vector<32x128xf32>
    %17 = arith.addf %14, %16 : vector<32x128xf32>
    %cst_17 = arith.constant 0.000000e+00 : f32
    %18 = vector.broadcast %cst_17 : f32 to vector<32x128xf32>
    %19 = arith.maximumf %17, %18 : vector<32x128xf32>
    %20 = arith.mulf %19, %11 : vector<32x128xf32>
    %c0_i32 = arith.constant 0 : i32
    %21 = arith.cmpi eq, %arg0, %c0_i32 : i32
    %22 = arith.extui %21 : i1 to i32
    %c0_i32_18 = arith.constant 0 : i32
    %23 = arith.cmpi ne, %22, %c0_i32_18 : i32
    scf.if %23 {
      %cst_41 = arith.constant 0.000000e+00 : bf16
      %48 = vector.broadcast %cst_41 : bf16 to vector<2x128xbf16>
      %c0_42 = arith.constant 0 : index
      %c0_43 = arith.constant 0 : index
      %49 = vector.load %arg10[%c0_42, %c0_43] : memref<36x128xbf16, #tpu.memory_space<vmem>>, vector<2x128xbf16>
      tpu.vector_store %arg10[%c0_42, %c0_43], %48 {strides = array<i32>} : memref<36x128xbf16, #tpu.memory_space<vmem>>, vector<2x128xbf16>,
      %cst_44 = arith.constant 0.000000e+00 : bf16
      %50 = vector.broadcast %cst_44 : bf16 to vector<2x128xbf16>
      %c34 = arith.constant 34 : index
      %c0_45 = arith.constant 0 : index
      %51 = vector.load %arg10[%c34, %c0_45] : memref<36x128xbf16, #tpu.memory_space<vmem>>, vector<2x128xbf16>
      tpu.vector_store %arg10[%c34, %c0_45], %50 {strides = array<i32>} : memref<36x128xbf16, #tpu.memory_space<vmem>>, vector<2x128xbf16>,
    } else {
    }
    %24 = arith.truncf %20 : vector<32x128xf32> to vector<32x128xbf16>
    %c2_19 = arith.constant 2 : index
    %c0_20 = arith.constant 0 : index
    %25 = vector.load %arg10[%c2_19, %c0_20] : memref<36x128xbf16, #tpu.memory_space<vmem>>, vector<32x128xbf16>
    tpu.vector_store %arg10[%c2_19, %c0_20], %24 {strides = array<i32>} : memref<36x128xbf16, #tpu.memory_space<vmem>>, vector<32x128xbf16>,
    %c0_21 = arith.constant 0 : index
    %c0_22 = arith.constant 0 : index
    %26 = vector.load %arg10[%c0_21, %c0_22] : memref<36x128xbf16, #tpu.memory_space<vmem>>, vector<32x128xbf16>
    %c2_23 = arith.constant 2 : index
    %c0_24 = arith.constant 0 : index
    %27 = vector.load %arg10[%c2_23, %c0_24] : memref<36x128xbf16, #tpu.memory_space<vmem>>, vector<32x128xbf16>
    %c4_25 = arith.constant 4 : index
    %c0_26 = arith.constant 0 : index
    %28 = vector.load %arg10[%c4_25, %c0_26] : memref<36x128xbf16, #tpu.memory_space<vmem>>, vector<32x128xbf16>
    %29 = tpu.concatenate %26, %27, %28 in 1 : vector<32x128xbf16>, vector<32x128xbf16>, vector<32x128xbf16> -> vector<32x384xbf16>
    %c0_27 = arith.constant 0 : index
    %c0_28 = arith.constant 0 : index
    %30 = vector.load %arg3[%c0_27, %c0_28] : memref<384x128xbf16, #tpu.memory_space<vmem>>, vector<384x128xbf16>
    %cst_29 = arith.constant dense<0.000000e+00> : vector<32x128xf32>
    %31 = tpu.matmul %29, %30, %cst_29 {dimension_numbers = #tpu.dot_dimension_numbers<[1], [0], [0], [1], [0, 0, 1, 1], [], []>} : vector<32x384xbf16>, vector<384x128xbf16>, vector<32x128xf32> -> vector<32x128xf32>
    %c0_30 = arith.constant 0 : index
    %c2_31 = arith.constant 2 : index
    %c0_32 = arith.constant 0 : index
    %32 = vector.load %arg1[%c0_30, %c2_31, %c0_32] : memref<1x36x128xbf16, #tpu.memory_space<vmem>>, vector<1x32x128xbf16>
    %33 = vector.shape_cast %32 : vector<1x32x128xbf16> to vector<32x128xbf16>
    %34 = arith.extf %33 : vector<32x128xbf16> to vector<32x128xf32>
    %c0_33 = arith.constant 0 : index
    %c0_34 = arith.constant 0 : index
    %35 = vector.load %arg6[%c0_33, %c0_34] : memref<1x128xf32, #tpu.memory_space<vmem>>, vector<1x128xf32>
    %36 = vector.broadcast %35 : vector<1x128xf32> to vector<32x128xf32>
    %37 = arith.mulf %31, %36 : vector<32x128xf32>
    %c0_35 = arith.constant 0 : index
    %c0_36 = arith.constant 0 : index
    %38 = vector.load %arg7[%c0_35, %c0_36] : memref<1x128xf32, #tpu.memory_space<vmem>>, vector<1x128xf32>
    %39 = vector.broadcast %38 : vector<1x128xf32> to vector<32x128xf32>
    %40 = arith.addf %37, %39 : vector<32x128xf32>
    %41 = arith.mulf %40, %11 : vector<32x128xf32>
    %42 = arith.addf %41, %34 : vector<32x128xf32>
    %cst_37 = arith.constant 0.000000e+00 : f32
    %43 = vector.broadcast %cst_37 : f32 to vector<32x128xf32>
    %44 = arith.maximumf %42, %43 : vector<32x128xf32>
    %c0_38 = arith.constant 0 : index
    %c0_39 = arith.constant 0 : index
    %c0_40 = arith.constant 0 : index
    %45 = vector.load %arg9[%c0_38, %c0_39, %c0_40] : memref<1x32x128xf32, #tpu.memory_space<vmem>>, vector<1x32x128xf32>
    %46 = vector.shape_cast %45 : vector<1x32x128xf32> to vector<32x128xf32>
    %47 = vector.shape_cast %44 : vector<32x128xf32> to vector<1x32x128xf32>
    tpu.vector_store %arg9[%c0_38, %c0_39, %c0_40], %47 {strides = array<i32>} : memref<1x32x128xf32, #tpu.memory_space<vmem>>, vector<1x32x128xf32>,
    return
  }
  func.func @transform_0(%arg0: i32) -> (i32, i32, i32) {
    %c0_i32 = arith.constant 0 : i32
    %c0_i32_0 = arith.constant 0 : i32
    %c0_i32_1 = arith.constant 0 : i32
    return %arg0, %c0_i32, %c0_i32_0 : i32, i32, i32
  }
  func.func @transform_1(%arg0: i32) -> (i32, i32) {
    %c0_i32 = arith.constant 0 : i32
    %c0_i32_0 = arith.constant 0 : i32
    %c0_i32_1 = arith.constant 0 : i32
    return %c0_i32, %c0_i32_0 : i32, i32
  }
  func.func @transform_2(%arg0: i32) -> (i32, i32) {
    %c0_i32 = arith.constant 0 : i32
    %c0_i32_0 = arith.constant 0 : i32
    %c0_i32_1 = arith.constant 0 : i32
    return %c0_i32, %c0_i32_0 : i32, i32
  }
  func.func @transform_3(%arg0: i32) -> (i32, i32, i32) {
    %c0_i32 = arith.constant 0 : i32
    %c0_i32_0 = arith.constant 0 : i32
    %c0_i32_1 = arith.constant 0 : i32
    return %arg0, %c0_i32, %c0_i32_0 : i32, i32, i32
  }
  func.func @transform_4(%arg0: i32) -> (i32, i32, i32) {
    %c0_i32 = arith.constant 0 : i32
    %c0_i32_0 = arith.constant 0 : i32
    %c0_i32_1 = arith.constant 0 : i32
    return %arg0, %c0_i32, %c0_i32_0 : i32, i32, i32
  }
  func.func @transform_5(%arg0: i32) -> (i32, i32) {
    %c0_i32 = arith.constant 0 : i32
    %c0_i32_0 = arith.constant 0 : i32
    %c0_i32_1 = arith.constant 0 : i32
    return %c0_i32, %c0_i32_0 : i32, i32
  }
  func.func @transform_6(%arg0: i32) -> (i32, i32) {
    %c0_i32 = arith.constant 0 : i32
    %c0_i32_0 = arith.constant 0 : i32
    %c0_i32_1 = arith.constant 0 : i32
    return %c0_i32, %c0_i32_0 : i32, i32
  }
  func.func @transform_7(%arg0: i32) -> (i32, i32, i32) {
    %c0_i32 = arith.constant 0 : i32
    %c0_i32_0 = arith.constant 0 : i32
    %c0_i32_1 = arith.constant 0 : i32
    return %arg0, %c0_i32, %c0_i32_0 : i32, i32, i32
  }
  func.func @transform_8(%arg0: i32) -> (i32, i32, i32) {
    %c0_i32 = arith.constant 0 : i32
    %c0_i32_0 = arith.constant 0 : i32
    %c0_i32_1 = arith.constant 0 : i32
    return %arg0, %c0_i32, %c0_i32_0 : i32, i32, i32
  }
}

</mosaic_0001>

<llo_original>
// kernel: tpu_custom_call.1
$region0: #{tpu_custom_call.1}
  #allocation0 [shape = 'u32[]', space=smem, size = 0x4, offset = 0x4, fixed_abs, tag = 'smem constant byte address 0x4 - core index']
  #allocation1 [shape = 'u32[144,128]{1,0:T(1,128)}', space=vmem, size = 0x12000, scoped, tag = 'internal scratch']
  #allocation2 [shape = 'bf16[36,128]{1,0:T(8,128)(2,1)}', space=vmem, size = 0x2800, scoped, tag = 'scratch operand']
  %s0 = inlined_call_operand.hbm [shape: bf16[1,36,128], index: 0, kind: input, shape index: {}]
  %s1 = inlined_call_operand.hbm [shape: bf16[384,128], index: 1, kind: input, shape index: {}]
  %s2 = inlined_call_operand.hbm [shape: bf16[384,128], index: 2, kind: input, shape index: {}]
  %s3 = inlined_call_operand.hbm [shape: f32[1,32,128], index: 3, kind: input, shape index: {}]
  %s4 = inlined_call_operand.hbm [shape: f32[1,32,128], index: 4, kind: input, shape index: {}]
  %s5 = inlined_call_operand.vmem [shape: f32[1,128], index: 5, kind: input, shape index: {}]
  %s6 = inlined_call_operand.vmem [shape: f32[1,128], index: 6, kind: input, shape index: {}]
  %s7 = inlined_call_operand.hbm [shape: bf16[1,32,128], index: 7, kind: input, shape index: {}]
  %s8 = inlined_call_operand.hbm [shape: f32[1,32,128], index: 8, kind: output, shape index: {}]
  %s9 = sld [smem:[#allocation0]]
  $region70: #{tpu_custom_call.1} parent=0
    _
  %s11 = ssub.s32 1, %s9
  %s12 = scalar_select 0, %s11, %s9
  $region1: #{tpu_custom_call.1} parent=0
    #allocation3 [shape = 'u8[10240]{0}', space=vmem, size = 0x2800, scoped, tag = 'input window, operand 0, single buffered']
    #allocation4 [shape = 's32[1]{0}', space=sflag, size = 0x4, scoped, tag = 'scoped memory for tpu_custom_call.1']
    #allocation5 [shape = 's32[1]{0}', space=sflag, size = 0x4, scoped, tag = 'scoped memory for tpu_custom_call.1']
    #allocation6 [shape = 'u8[98304]{0}', space=vmem, size = 0x18000, scoped, tag = 'input window, operand 1, single buffered']
    #allocation7 [shape = 's32[1]{0}', space=sflag, size = 0x4, scoped, tag = 'scoped memory for tpu_custom_call.1']
    #allocation8 [shape = 'u8[98304]{0}', space=vmem, size = 0x18000, scoped, tag = 'input window, operand 2, single buffered']
    #allocation9 [shape = 'u8[16384]{0}', space=vmem, size = 0x4000, scoped, tag = 'input window, operand 3, single buffered']
    #allocation10 [shape = 's32[1]{0}', space=sflag, size = 0x4, scoped, tag = 'scoped memory for tpu_custom_call.1']
    #allocation11 [shape = 'u8[16384]{0}', space=vmem, size = 0x4000, scoped, tag = 'input window, operand 4, single buffered']
    #allocation12 [shape = 'u8[8192]{0}', space=vmem, size = 0x2000, scoped, tag = 'input window, operand 7, single buffered']
    #allocation13 [shape = 's32[1]{0}', space=sflag, size = 0x4, scoped, tag = 'scoped memory for tpu_custom_call.1']
    #allocation14 [shape = 'u8[16384]{0}', space=vmem, size = 0x4000, scoped, tag = 'output window, operand 0, single buffered']
    %13 = vsyncpa [#allocation4], 0
    %14 = vsyncpa [#allocation7], 0
    %15 = vsyncpa [#allocation10], 0
    %16 = vsyncpa [#allocation13], 0
    %17 = vsyncpa [#allocation5], 0
    // Predicated region
    $region2: #{tpu_custom_call.1} parent=1 // pred_check
      _
    $region3: #{tpu_custom_call.1} parent=1 // pred_check_branch
      %19 = sbr.rel (0) target = $region5
    $region4: #{tpu_custom_call.1} parent=1 // pred_region
      %s21 = ssub.s32 320, 320
      %22 = vsyncadd [#allocation4], %s21
      %s23 = sshll.u32 [#allocation3], 4
      %s24 = int_to_ptr.vmem [resolvable:$true] %s23
      %29 = dma.hbm_to_vmem [thread:$0]  %s0, 320, %s24, [#allocation4], 64, 64, 4
    $region5: #{tpu_custom_call.1} parent=1 // pred_fallthru
      _
    // Predicated region
    $region6: #{tpu_custom_call.1} parent=1 // pred_check
      _
    $region7: #{tpu_custom_call.1} parent=1 // pred_check_branch
      %31 = sbr.rel (0) target = $region9
    $region8: #{tpu_custom_call.1} parent=1 // pred_region
      %s33 = ssub.s32 3072, 3072
      %34 = vsyncadd [#allocation7], %s33
      %s35 = sshll.u32 [#allocation6], 4
      %s36 = int_to_ptr.vmem [resolvable:$true] %s35
      %41 = dma.hbm_to_vmem [thread:$0]  %s1, 3072, %s36, [#allocation7], 64, 64, 4
    $region9: #{tpu_custom_call.1} parent=1 // pred_fallthru
      _
    // Predicated region
    $region10: #{tpu_custom_call.1} parent=1 // pred_check
      _
    $region11: #{tpu_custom_call.1} parent=1 // pred_check_branch
      %43 = sbr.rel (0) target = $region13
    $region12: #{tpu_custom_call.1} parent=1 // pred_region
      %s45 = ssub.s32 3072, 3072
      %46 = vsyncadd [#allocation7], %s45
      %s47 = sshll.u32 [#allocation8], 4
      %s48 = int_to_ptr.vmem [resolvable:$true] %s47
      %53 = dma.hbm_to_vmem [thread:$0]  %s2, 3072, %s48, [#allocation7], 64, 64, 4
    $region13: #{tpu_custom_call.1} parent=1 // pred_fallthru
      _
    // Predicated region
    $region14: #{tpu_custom_call.1} parent=1 // pred_check
      _
    $region15: #{tpu_custom_call.1} parent=1 // pred_check_branch
      %55 = sbr.rel (0) target = $region17
    $region16: #{tpu_custom_call.1} parent=1 // pred_region
      %s57 = ssub.s32 512, 512
      %58 = vsyncadd [#allocation10], %s57
      %s59 = sshll.u32 [#allocation9], 4
      %s60 = int_to_ptr.vmem [resolvable:$true] %s59
      %65 = dma.hbm_to_vmem [thread:$0]  %s3, 512, %s60, [#allocation10], 128, 128, 8
    $region17: #{tpu_custom_call.1} parent=1 // pred_fallthru
      _
    // Predicated region
    $region18: #{tpu_custom_call.1} parent=1 // pred_check
      _
    $region19: #{tpu_custom_call.1} parent=1 // pred_check_branch
      %67 = sbr.rel (0) target = $region21
    $region20: #{tpu_custom_call.1} parent=1 // pred_region
      %s69 = ssub.s32 512, 512
      %70 = vsyncadd [#allocation10], %s69
      %s71 = sshll.u32 [#allocation11], 4
      %s72 = int_to_ptr.vmem [resolvable:$true] %s71
      %77 = dma.hbm_to_vmem [thread:$0]  %s4, 512, %s72, [#allocation10], 128, 128, 8
    $region21: #{tpu_custom_call.1} parent=1 // pred_fallthru
      _
    // Predicated region
    $region22: #{tpu_custom_call.1} parent=1 // pred_check
      _
    $region23: #{tpu_custom_call.1} parent=1 // pred_check_branch
      %79 = sbr.rel (0) target = $region25
    $region24: #{tpu_custom_call.1} parent=1 // pred_region
      _
    $region25: #{tpu_custom_call.1} parent=1 // pred_fallthru
      _
    // Predicated region
    $region26: #{tpu_custom_call.1} parent=1 // pred_check
      _
    $region27: #{tpu_custom_call.1} parent=1 // pred_check_branch
      %81 = sbr.rel (0) target = $region29
    $region28: #{tpu_custom_call.1} parent=1 // pred_region
      _
    $region29: #{tpu_custom_call.1} parent=1 // pred_fallthru
      _
    // Predicated region
    $region30: #{tpu_custom_call.1} parent=1 // pred_check
      _
    $region31: #{tpu_custom_call.1} parent=1 // pred_check_branch
      %83 = sbr.rel (0) target = $region33
    $region32: #{tpu_custom_call.1} parent=1 // pred_region
      %s85 = ssub.s32 256, 256
      %86 = vsyncadd [#allocation13], %s85
      %s87 = sshll.u32 [#allocation12], 4
      %s88 = int_to_ptr.vmem [resolvable:$true] %s87
      %93 = dma.hbm_to_vmem [thread:$0]  %s7, 256, %s88, [#allocation13], 64, 64, 4
    $region33: #{tpu_custom_call.1} parent=1 // pred_fallthru
      _
    // Predicated region
    $region34: #{tpu_custom_call.1} parent=1 // pred_check
      _
    $region35: #{tpu_custom_call.1} parent=1 // pred_check_branch
      %95 = sbr.rel (0) target = $region37
    $region36: #{tpu_custom_call.1} parent=1 // pred_region
      %96 = dma.done [#allocation4], 320
    $region37: #{tpu_custom_call.1} parent=1 // pred_fallthru
      _
    // Predicated region
    $region38: #{tpu_custom_call.1} parent=1 // pred_check
      _
    $region39: #{tpu_custom_call.1} parent=1 // pred_check_branch
      %98 = sbr.rel (0) target = $region41
    $region40: #{tpu_custom_call.1} parent=1 // pred_region
      %99 = dma.done [#allocation7], 3072
    $region41: #{tpu_custom_call.1} parent=1 // pred_fallthru
      _
    // Predicated region
    $region42: #{tpu_custom_call.1} parent=1 // pred_check
      _
    $region43: #{tpu_custom_call.1} parent=1 // pred_check_branch
      %101 = sbr.rel (0) target = $region45
    $region44: #{tpu_custom_call.1} parent=1 // pred_region
      %102 = dma.done [#allocation7], 3072
    $region45: #{tpu_custom_call.1} parent=1 // pred_fallthru
      _
    // Predicated region
    $region46: #{tpu_custom_call.1} parent=1 // pred_check
      _
    $region47: #{tpu_custom_call.1} parent=1 // pred_check_branch
      %104 = sbr.rel (0) target = $region49
    $region48: #{tpu_custom_call.1} parent=1 // pred_region
      %105 = dma.done [#allocation10], 512
    $region49: #{tpu_custom_call.1} parent=1 // pred_fallthru
      _
    // Predicated region
    $region50: #{tpu_custom_call.1} parent=1 // pred_check
      _
    $region51: #{tpu_custom_call.1} parent=1 // pred_check_branch
      %107 = sbr.rel (0) target = $region53
    $region52: #{tpu_custom_call.1} parent=1 // pred_region
      %108 = dma.done [#allocation10], 512
    $region53: #{tpu_custom_call.1} parent=1 // pred_fallthru
      _
    // Predicated region
    $region54: #{tpu_custom_call.1} parent=1 // pred_check
      _
    $region55: #{tpu_custom_call.1} parent=1 // pred_check_branch
      %110 = sbr.rel (0) target = $region57
    $region56: #{tpu_custom_call.1} parent=1 // pred_region
      %111 = dma.done [#allocation13], 256
    $region57: #{tpu_custom_call.1} parent=1 // pred_fallthru
      _
    %v113 = vld [vmem:[#allocation3] sm:$0xf]
    %v114 = vld [vmem:[#allocation3 + $0x4] sm:$0xf]
    %v115 = vld [vmem:[#allocation3 + $0x8] sm:$0xf]
    %v116 = vld [vmem:[#allocation3 + $0xc] sm:$0xf]
    %v117 = vld [vmem:[#allocation3] sm:$0xe]
    %v118 = vld [vmem:[#allocation3 + $0x10] sm:$0x1]
    %v119 = vld [vmem:[#allocation3] sm:$0xc]
    %v120 = vld [vmem:[#allocation3 + $0x10] sm:$0x3]
    %v125 = vunpack.c.l.b16 %v113
    %v126 = vunpack.c.l.b16 %v114
    %v127 = vunpack.c.l.b16 %v115
    %v128 = vunpack.c.l.b16 %v116
    %v129 = vpack.c.b16 %v126, %v125
    %v130 = vpack.c.b16 %v128, %v127
    %v135 = vunpack.c.l.b16 %v117
    %v136 = vunpack.c.l.b16 %v118
    %v137 = vpack.c.b16 %v126, %v135
    %v138 = vpack.c.b16 %v136, %v136
    %vm139 = vcmask 1046528
    %v140 = vrot.slane %v137, 1
    %v141 = vrot.slane %v130, 1
    %v142 = vsel %vm139, %v140, %v141
    %v143 = vrot.slane %v138, 1
    %v144 = vsel %vm139, %v141, %v143
    %v149 = vunpack.c.l.b16 %v119
    %v150 = vunpack.c.l.b16 %v120
    %v151 = vpack.c.b16 %v126, %v149
    %v152 = vpack.c.b16 %v150, %v150
    %vm153 = vcmask 1045504
    %v154 = vrot.slane %v151, 2
    %v155 = vrot.slane %v130, 2
    %v156 = vsel %vm153, %v154, %v155
    %v157 = vrot.slane %v152, 2
    %v158 = vsel %vm153, %v155, %v157
    %v161 = vld [vmem:[#allocation6] sm:$0xf]
    %v162 = vld [vmem:[#allocation6 + $0x4] sm:$0xf]
    %v163 = vld [vmem:[#allocation6 + $0x8] sm:$0xf]
    %v164 = vld [vmem:[#allocation6 + $0xc] sm:$0xf]
    %v165 = vld [vmem:[#allocation6 + $0x10] sm:$0xf]
    %v166 = vld [vmem:[#allocation6 + $0x14] sm:$0xf]
    %v167 = vld [vmem:[#allocation6 + $0x18] sm:$0xf]
    %v168 = vld [vmem:[#allocation6 + $0x1c] sm:$0xf]
    %v169 = vld [vmem:[#allocation6 + $0x20] sm:$0xf]
    %v170 = vld [vmem:[#allocation6 + $0x24] sm:$0xf]
    %v171 = vld [vmem:[#allocation6 + $0x28] sm:$0xf]
    %v172 = vld [vmem:[#allocation6 + $0x2c] sm:$0xf]
    %v173 = vld [vmem:[#allocation6 + $0x30] sm:$0xf]
    %v174 = vld [vmem:[#allocation6 + $0x34] sm:$0xf]
    %v175 = vld [vmem:[#allocation6 + $0x38] sm:$0xf]
    %v176 = vld [vmem:[#allocation6 + $0x3c] sm:$0xf]
    %v177 = vld [vmem:[#allocation6 + $0x40] sm:$0xf]
    %v178 = vld [vmem:[#allocation6 + $0x44] sm:$0xf]
    %v179 = vld [vmem:[#allocation6 + $0x48] sm:$0xf]
    %v180 = vld [vmem:[#allocation6 + $0x4c] sm:$0xf]
    %v181 = vld [vmem:[#allocation6 + $0x50] sm:$0xf]
    %v182 = vld [vmem:[#allocation6 + $0x54] sm:$0xf]
    %v183 = vld [vmem:[#allocation6 + $0x58] sm:$0xf]
    %v184 = vld [vmem:[#allocation6 + $0x5c] sm:$0xf]
    %v185 = vld [vmem:[#allocation6 + $0x60] sm:$0xf]
    %v186 = vld [vmem:[#allocation6 + $0x64] sm:$0xf]
    %v187 = vld [vmem:[#allocation6 + $0x68] sm:$0xf]
    %v188 = vld [vmem:[#allocation6 + $0x6c] sm:$0xf]
    %v189 = vld [vmem:[#allocation6 + $0x70] sm:$0xf]
    %v190 = vld [vmem:[#allocation6 + $0x74] sm:$0xf]
    %v191 = vld [vmem:[#allocation6 + $0x78] sm:$0xf]
    %v192 = vld [vmem:[#allocation6 + $0x7c] sm:$0xf]
    %v193 = vld [vmem:[#allocation6 + $0x80] sm:$0xf]
    %v194 = vld [vmem:[#allocation6 + $0x84] sm:$0xf]
    %v195 = vld [vmem:[#allocation6 + $0x88] sm:$0xf]
    %v196 = vld [vmem:[#allocation6 + $0x8c] sm:$0xf]
    %v197 = vld [vmem:[#allocation6 + $0x90] sm:$0xf]
    %v198 = vld [vmem:[#allocation6 + $0x94] sm:$0xf]
    %v199 = vld [vmem:[#allocation6 + $0x98] sm:$0xf]
    %v200 = vld [vmem:[#allocation6 + $0x9c] sm:$0xf]
    %v201 = vld [vmem:[#allocation6 + $0xa0] sm:$0xf]
    %v202 = vld [vmem:[#allocation6 + $0xa4] sm:$0xf]
    %v203 = vld [vmem:[#allocation6 + $0xa8] sm:$0xf]
    %v204 = vld [vmem:[#allocation6 + $0xac] sm:$0xf]
    %v205 = vld [vmem:[#allocation6 + $0xb0] sm:$0xf]
    %v206 = vld [vmem:[#allocation6 + $0xb4] sm:$0xf]
    %v207 = vld [vmem:[#allocation6 + $0xb8] sm:$0xf]
    %v208 = vld [vmem:[#allocation6 + $0xbc] sm:$0xf]
    %v257 = vunpack.c.l.b16 %v161
    %v258 = vunpack.c.l.b16 %v162
    %v259 = vunpack.c.l.b16 %v163
    %v260 = vunpack.c.l.b16 %v164
    %v261 = vunpack.c.l.b16 %v165
    %v262 = vunpack.c.l.b16 %v166
    %v263 = vunpack.c.l.b16 %v167
    %v264 = vunpack.c.l.b16 %v168
    %v265 = vunpack.c.l.b16 %v169
    %v266 = vunpack.c.l.b16 %v170
    %v267 = vunpack.c.l.b16 %v171
    %v268 = vunpack.c.l.b16 %v172
    %v269 = vunpack.c.l.b16 %v173
    %v270 = vunpack.c.l.b16 %v174
    %v271 = vunpack.c.l.b16 %v175
    %v272 = vunpack.c.l.b16 %v176
    %v273 = vunpack.c.l.b16 %v177
    %v274 = vunpack.c.l.b16 %v178
    %v275 = vunpack.c.l.b16 %v179
    %v276 = vunpack.c.l.b16 %v180
    %v277 = vunpack.c.l.b16 %v181
    %v278 = vunpack.c.l.b16 %v182
    %v279 = vunpack.c.l.b16 %v183
    %v280 = vunpack.c.l.b16 %v184
    %v281 = vunpack.c.l.b16 %v185
    %v282 = vunpack.c.l.b16 %v186
    %v283 = vunpack.c.l.b16 %v187
    %v284 = vunpack.c.l.b16 %v188
    %v285 = vunpack.c.l.b16 %v189
    %v286 = vunpack.c.l.b16 %v190
    %v287 = vunpack.c.l.b16 %v191
    %v288 = vunpack.c.l.b16 %v192
    %v289 = vunpack.c.l.b16 %v193
    %v290 = vunpack.c.l.b16 %v194
    %v291 = vunpack.c.l.b16 %v195
    %v292 = vunpack.c.l.b16 %v196
    %v293 = vunpack.c.l.b16 %v197
    %v294 = vunpack.c.l.b16 %v198
    %v295 = vunpack.c.l.b16 %v199
    %v296 = vunpack.c.l.b16 %v200
    %v297 = vunpack.c.l.b16 %v201
    %v298 = vunpack.c.l.b16 %v202
    %v299 = vunpack.c.l.b16 %v203
    %v300 = vunpack.c.l.b16 %v204
    %v301 = vunpack.c.l.b16 %v205
    %v302 = vunpack.c.l.b16 %v206
    %v303 = vunpack.c.l.b16 %v207
    %v304 = vunpack.c.l.b16 %v208
    %v305 = vpack.c.b16 %v258, %v257
    %v306 = vpack.c.b16 %v260, %v259
    %v307 = vpack.c.b16 %v262, %v261
    %v308 = vpack.c.b16 %v264, %v263
    %v309 = vpack.c.b16 %v266, %v265
    %v310 = vpack.c.b16 %v268, %v267
    %v311 = vpack.c.b16 %v270, %v269
    %v312 = vpack.c.b16 %v272, %v271
    %v313 = vpack.c.b16 %v274, %v273
    %v314 = vpack.c.b16 %v276, %v275
    %v315 = vpack.c.b16 %v278, %v277
    %v316 = vpack.c.b16 %v280, %v279
    %v317 = vpack.c.b16 %v282, %v281
    %v318 = vpack.c.b16 %v284, %v283
    %v319 = vpack.c.b16 %v286, %v285
    %v320 = vpack.c.b16 %v288, %v287
    %v321 = vpack.c.b16 %v290, %v289
    %v322 = vpack.c.b16 %v292, %v291
    %v323 = vpack.c.b16 %v294, %v293
    %v324 = vpack.c.b16 %v296, %v295
    %v325 = vpack.c.b16 %v298, %v297
    %v326 = vpack.c.b16 %v300, %v299
    %v327 = vpack.c.b16 %v302, %v301
    %v328 = vpack.c.b16 %v304, %v303
    %353 = vmatprep.subr.bf16.mxu0 0
    %354 = vmatpush1.bf16.msra.mxu0 %v312
    %355 = vmatprep.subr.bf16.mxu0 0
    %356 = vmatpush1.bf16.msra.mxu0 %v311
    %357 = vmatprep.subr.bf16.mxu0 0
    %358 = vmatpush1.bf16.msra.mxu0 %v310
    %359 = vmatprep.subr.bf16.mxu0 0
    %360 = vmatpush1.bf16.msra.mxu0 %v309
    %361 = vmatprep.subr.bf16.mxu0 0
    %362 = vmatpush1.bf16.msra.mxu0 %v308
    %363 = vmatprep.subr.bf16.mxu0 0
    %364 = vmatpush1.bf16.msra.mxu0 %v307
    %365 = vmatprep.subr.bf16.mxu0 0
    %366 = vmatpush1.bf16.msra.mxu0 %v306
    %367 = vmatprep.subr.bf16.mxu0 0
    %368 = vmatpush1.bf16.msra.mxu0 %v305
    %369 = vmatprep.subr.bf16.mxu0 0
    %370 = vmatpush2.bf16.msra.mxu0 %v320
    %371 = vmatprep.subr.bf16.mxu0 0
    %372 = vmatpush2.bf16.msra.mxu0 %v319
    %373 = vmatprep.subr.bf16.mxu0 0
    %374 = vmatpush2.bf16.msra.mxu0 %v318
    %375 = vmatprep.subr.bf16.mxu0 0
    %376 = vmatpush2.bf16.msra.mxu0 %v317
    %377 = vmatprep.subr.bf16.mxu0 0
    %378 = vmatpush2.bf16.msra.mxu0 %v316
    %379 = vmatprep.subr.bf16.mxu0 0
    %380 = vmatpush2.bf16.msra.mxu0 %v315
    %381 = vmatprep.subr.bf16.mxu0 0
    %382 = vmatpush2.bf16.msra.mxu0 %v314
    %383 = vmatprep.subr.bf16.mxu0 0
    %384 = vmatpush2.bf16.msra.mxu0 %v313
    %385 = vmatprep.mubr.bf16.mxu0 %v142
    %386 = vmatmul.mubr.bf16.gmra.mxu0 %v129
    %v387 = vpop.f32.mrf.mxu0
    %v388 = vadd.f32 0.0, %v387
    %v389 = vpop.f32.mrf.mxu0
    %v390 = vpop.f32.mrf.mxu0
    %v391 = vadd.f32 0.0, %v390
    %v392 = vpop.f32.mrf.mxu0
    %393 = vmatprep.mubr.bf16.mxu0 %v144
    %394 = vmatmul.mubr.bf16.gmra.mxu0 %v130
    %v395 = vpop.f32.mrf.mxu0
    %v396 = vadd.f32 0.0, %v395
    %v397 = vpop.f32.mrf.mxu0
    %v398 = vpop.f32.mrf.mxu0
    %v399 = vadd.f32 0.0, %v398
    %v400 = vpop.f32.mrf.mxu0
    %401 = vdwg.mxu0
    %402 = vmatprep.subr.bf16.mxu0 0
    %403 = vmatpush1.bf16.msra.mxu0 %v328
    %404 = vmatprep.subr.bf16.mxu0 0
    %405 = vmatpush1.bf16.msra.mxu0 %v327
    %406 = vmatprep.subr.bf16.mxu0 0
    %407 = vmatpush1.bf16.msra.mxu0 %v326
    %408 = vmatprep.subr.bf16.mxu0 0
    %409 = vmatpush1.bf16.msra.mxu0 %v325
    %410 = vmatprep.subr.bf16.mxu0 0
    %411 = vmatpush1.bf16.msra.mxu0 %v324
    %412 = vmatprep.subr.bf16.mxu0 0
    %413 = vmatpush1.bf16.msra.mxu0 %v323
    %414 = vmatprep.subr.bf16.mxu0 0
    %415 = vmatpush1.bf16.msra.mxu0 %v322
    %416 = vmatprep.subr.bf16.mxu0 0
    %417 = vmatpush1.bf16.msra.mxu0 %v321
    %418 = vmatprep.subr.bf16.mxu0 0
    %419 = vmatpush2.bf16.msra.mxu0 0
    %420 = vmatprep.subr.bf16.mxu0 0
    %421 = vmatpush2.bf16.msra.mxu0 0
    %422 = vmatprep.subr.bf16.mxu0 0
    %423 = vmatpush2.bf16.msra.mxu0 0
    %424 = vmatprep.subr.bf16.mxu0 0
    %425 = vmatpush2.bf16.msra.mxu0 0
    %426 = vmatprep.subr.bf16.mxu0 0
    %427 = vmatpush2.bf16.msra.mxu0 0
    %428 = vmatprep.subr.bf16.mxu0 0
    %429 = vmatpush2.bf16.msra.mxu0 0
    %430 = vmatprep.subr.bf16.mxu0 0
    %431 = vmatpush2.bf16.msra.mxu0 0
    %432 = vmatprep.subr.bf16.mxu0 0
    %433 = vmatpush2.bf16.msra.mxu0 0
    %434 = vmatprep.mubr.bf16.mxu0 0
    %435 = vmatmul.mubr.bf16.gmra.mxu0 %v156
    %v436 = vpop.f32.mrf.mxu0
    %v437 = vadd.f32 %v388, %v436
    %v438 = vpop.f32.mrf.mxu0
    %v439 = vpop.f32.mrf.mxu0
    %v440 = vadd.f32 %v391, %v439
    %v441 = vpop.f32.mrf.mxu0
    %442 = vmatprep.mubr.bf16.mxu0 0
    %443 = vmatmul.mubr.bf16.gmra.mxu0 %v158
    %v444 = vpop.f32.mrf.mxu0
    %v445 = vadd.f32 %v396, %v444
    %v446 = vpop.f32.mrf.mxu0
    %v447 = vpop.f32.mrf.mxu0
    %v448 = vadd.f32 %v399, %v447
    %v449 = vpop.f32.mrf.mxu0
    %450 = vdwg.mxu0
    %v451 = vld [vmem:[#allocation12] sm:$0xf]
    %v452 = vld [vmem:[#allocation12 + $0x4] sm:$0xf]
    %v453 = vld [vmem:[#allocation12 + $0x8] sm:$0xf]
    %v454 = vld [vmem:[#allocation12 + $0xc] sm:$0xf]
    %v455 = vunpack.c.l.bf16 %v451
    %v456 = vunpack.c.l.bf16 %v452
    %v457 = vunpack.c.l.bf16 %v453
    %v458 = vunpack.c.l.bf16 %v454
    %v459 = vld [vmem:[#allocation9] sm:$0xff]
    %v460 = vld [vmem:[#allocation9 + $0x8] sm:$0xff]
    %v461 = vld [vmem:[#allocation9 + $0x10] sm:$0xff]
    %v462 = vld [vmem:[#allocation9 + $0x18] sm:$0xff]
    %v463 = vmul.f32 %v437, %v459
    %v464 = vmul.f32 %v440, %v460
    %v465 = vmul.f32 %v445, %v461
    %v466 = vmul.f32 %v448, %v462
    %v467 = vld [vmem:[#allocation11] sm:$0xff]
    %v468 = vld [vmem:[#allocation11 + $0x8] sm:$0xff]
    %v469 = vld [vmem:[#allocation11 + $0x10] sm:$0xff]
    %v470 = vld [vmem:[#allocation11 + $0x18] sm:$0xff]
    %v471 = vadd.f32 %v463, %v467
    %v472 = vadd.f32 %v464, %v468
    %v473 = vadd.f32 %v465, %v469
    %v474 = vadd.f32 %v466, %v470
    %v475 = vmax.f32 %v471, 0.0
    %v476 = vmax.f32 %v472, 0.0
    %v477 = vmax.f32 %v473, 0.0
    %v478 = vmax.f32 %v474, 0.0
    %v479 = vmul.f32 %v475, %v455
    %v480 = vmul.f32 %v476, %v456
    %v481 = vmul.f32 %v477, %v457
    %v482 = vmul.f32 %v478, %v458
    %p483 = scmp.eq.s32.totalorder 0, 0
    // Predicated region
    $region58: #{tpu_custom_call.1} parent=1 // pred_check
      %p484 = pneg %p483
    $region59: #{tpu_custom_call.1} parent=1 // pred_check_branch
      %486 = sbr.rel (%p484) target = $region61
    $region60: #{tpu_custom_call.1} parent=1 // pred_region
      %487 = vst [vmem:[#allocation2] sm:$0x1] 0
      %488 = vst [vmem:[#allocation2 + $0x10] sm:$0x2] 0
    $region61: #{tpu_custom_call.1} parent=1 // pred_fallthru
      _
    %v489 = vpack.c.bf16 %v480, %v479
    %v490 = vpack.c.bf16 %v482, %v481
    %v493 = vunpack.c.l.b16 %v489
    %v494 = vunpack.c.h.b16 %v489
    %v495 = vunpack.c.l.b16 %v490
    %v496 = vunpack.c.h.b16 %v490
    %v497 = vpack.c.b16 %v493, %v493
    %v498 = vpack.c.b16 %v494, %v494
    %v499 = vpack.c.b16 %v495, %v495
    %v500 = vpack.c.b16 %v496, %v496
    %vm501 = vcmask 1040384
    %vm502 = vcmask 1044484
    %vm503 = vmor %vm501, %vm502
    %v504 = vrot.slane %v497, 7
    %v505 = vrot.slane %v504, 4
    %v506 = vrot.slane %v498, 7
    %v507 = vsel %vm503, %v505, %v506
    %v508 = vrot.slane %v506, 4
    %v509 = vrot.slane %v499, 7
    %v510 = vsel %vm503, %v508, %v509
    %v511 = vrot.slane %v509, 4
    %v512 = vrot.slane %v500, 7
    %v513 = vsel %vm503, %v511, %v512
    %v514 = vrot.slane %v512, 4
    %520 = vst [vmem:[#allocation2] sm:$0xe] %v504
    %521 = vst [vmem:[#allocation2 + $0x4] sm:$0xf] %v507
    %522 = vst [vmem:[#allocation2 + $0x8] sm:$0xf] %v510
    %523 = vst [vmem:[#allocation2 + $0xc] sm:$0xf] %v513
    %524 = vst [vmem:[#allocation2 + $0x10] sm:$0x1] %v514
    %v525 = vld [vmem:[#allocation2] sm:$0xf]
    %v526 = vld [vmem:[#allocation2 + $0x4] sm:$0xf]
    %v527 = vld [vmem:[#allocation2 + $0x8] sm:$0xf]
    %v528 = vld [vmem:[#allocation2 + $0xc] sm:$0xf]
    %v529 = vld [vmem:[#allocation2] sm:$0xe]
    %v530 = vld [vmem:[#allocation2 + $0x10] sm:$0x1]
    %v531 = vld [vmem:[#allocation2] sm:$0xc]
    %v532 = vld [vmem:[#allocation2 + $0x10] sm:$0x3]
    %v537 = vunpack.c.l.b16 %v525
    %v538 = vunpack.c.l.b16 %v526
    %v539 = vunpack.c.l.b16 %v527
    %v540 = vunpack.c.l.b16 %v528
    %v541 = vpack.c.b16 %v538, %v537
    %v542 = vpack.c.b16 %v540, %v539
    %v547 = vunpack.c.l.b16 %v529
    %v548 = vunpack.c.l.b16 %v530
    %v549 = vpack.c.b16 %v538, %v547
    %v550 = vpack.c.b16 %v548, %v548
    %v551 = vrot.slane %v549, 1
    %v552 = vrot.slane %v542, 1
    %v553 = vsel %vm139, %v551, %v552
    %v554 = vrot.slane %v550, 1
    %v555 = vsel %vm139, %v552, %v554
    %v560 = vunpack.c.l.b16 %v531
    %v561 = vunpack.c.l.b16 %v532
    %v562 = vpack.c.b16 %v538, %v560
    %v563 = vpack.c.b16 %v561, %v561
    %v564 = vrot.slane %v562, 2
    %v565 = vrot.slane %v542, 2
    %v566 = vsel %vm153, %v564, %v565
    %v567 = vrot.slane %v563, 2
    %v568 = vsel %vm153, %v565, %v567
    %v571 = vld [vmem:[#allocation8] sm:$0xf]
    %v572 = vld [vmem:[#allocation8 + $0x4] sm:$0xf]
    %v573 = vld [vmem:[#allocation8 + $0x8] sm:$0xf]
    %v574 = vld [vmem:[#allocation8 + $0xc] sm:$0xf]
    %v575 = vld [vmem:[#allocation8 + $0x10] sm:$0xf]
    %v576 = vld [vmem:[#allocation8 + $0x14] sm:$0xf]
    %v577 = vld [vmem:[#allocation8 + $0x18] sm:$0xf]
    %v578 = vld [vmem:[#allocation8 + $0x1c] sm:$0xf]
    %v579 = vld [vmem:[#allocation8 + $0x20] sm:$0xf]
    %v580 = vld [vmem:[#allocation8 + $0x24] sm:$0xf]
    %v581 = vld [vmem:[#allocation8 + $0x28] sm:$0xf]
    %v582 = vld [vmem:[#allocation8 + $0x2c] sm:$0xf]
    %v583 = vld [vmem:[#allocation8 + $0x30] sm:$0xf]
    %v584 = vld [vmem:[#allocation8 + $0x34] sm:$0xf]
    %v585 = vld [vmem:[#allocation8 + $0x38] sm:$0xf]
    %v586 = vld [vmem:[#allocation8 + $0x3c] sm:$0xf]
    %v587 = vld [vmem:[#allocation8 + $0x40] sm:$0xf]
    %v588 = vld [vmem:[#allocation8 + $0x44] sm:$0xf]
    %v589 = vld [vmem:[#allocation8 + $0x48] sm:$0xf]
    %v590 = vld [vmem:[#allocation8 + $0x4c] sm:$0xf]
    %v591 = vld [vmem:[#allocation8 + $0x50] sm:$0xf]
    %v592 = vld [vmem:[#allocation8 + $0x54] sm:$0xf]
    %v593 = vld [vmem:[#allocation8 + $0x58] sm:$0xf]
    %v594 = vld [vmem:[#allocation8 + $0x5c] sm:$0xf]
    %v595 = vld [vmem:[#allocation8 + $0x60] sm:$0xf]
    %v596 = vld [vmem:[#allocation8 + $0x64] sm:$0xf]
    %v597 = vld [vmem:[#allocation8 + $0x68] sm:$0xf]
    %v598 = vld [vmem:[#allocation8 + $0x6c] sm:$0xf]
    %v599 = vld [vmem:[#allocation8 + $0x70] sm:$0xf]
    %v600 = vld [vmem:[#allocation8 + $0x74] sm:$0xf]
    %v601 = vld [vmem:[#allocation8 + $0x78] sm:$0xf]
    %v602 = vld [vmem:[#allocation8 + $0x7c] sm:$0xf]
    %v603 = vld [vmem:[#allocation8 + $0x80] sm:$0xf]
    %v604 = vld [vmem:[#allocation8 + $0x84] sm:$0xf]
    %v605 = vld [vmem:[#allocation8 + $0x88] sm:$0xf]
    %v606 = vld [vmem:[#allocation8 + $0x8c] sm:$0xf]
    %v607 = vld [vmem:[#allocation8 + $0x90] sm:$0xf]
    %v608 = vld [vmem:[#allocation8 + $0x94] sm:$0xf]
    %v609 = vld [vmem:[#allocation8 + $0x98] sm:$0xf]
    %v610 = vld [vmem:[#allocation8 + $0x9c] sm:$0xf]
    %v611 = vld [vmem:[#allocation8 + $0xa0] sm:$0xf]
    %v612 = vld [vmem:[#allocation8 + $0xa4] sm:$0xf]
    %v613 = vld [vmem:[#allocation8 + $0xa8] sm:$0xf]
    %v614 = vld [vmem:[#allocation8 + $0xac] sm:$0xf]
    %v615 = vld [vmem:[#allocation8 + $0xb0] sm:$0xf]
    %v616 = vld [vmem:[#allocation8 + $0xb4] sm:$0xf]
    %v617 = vld [vmem:[#allocation8 + $0xb8] sm:$0xf]
    %v618 = vld [vmem:[#allocation8 + $0xbc] sm:$0xf]
    %v667 = vunpack.c.l.b16 %v571
    %v668 = vunpack.c.l.b16 %v572
    %v669 = vunpack.c.l.b16 %v573
    %v670 = vunpack.c.l.b16 %v574
    %v671 = vunpack.c.l.b16 %v575
    %v672 = vunpack.c.l.b16 %v576
    %v673 = vunpack.c.l.b16 %v577
    %v674 = vunpack.c.l.b16 %v578
    %v675 = vunpack.c.l.b16 %v579
    %v676 = vunpack.c.l.b16 %v580
    %v677 = vunpack.c.l.b16 %v581
    %v678 = vunpack.c.l.b16 %v582
    %v679 = vunpack.c.l.b16 %v583
    %v680 = vunpack.c.l.b16 %v584
    %v681 = vunpack.c.l.b16 %v585
    %v682 = vunpack.c.l.b16 %v586
    %v683 = vunpack.c.l.b16 %v587
    %v684 = vunpack.c.l.b16 %v588
    %v685 = vunpack.c.l.b16 %v589
    %v686 = vunpack.c.l.b16 %v590
    %v687 = vunpack.c.l.b16 %v591
    %v688 = vunpack.c.l.b16 %v592
    %v689 = vunpack.c.l.b16 %v593
    %v690 = vunpack.c.l.b16 %v594
    %v691 = vunpack.c.l.b16 %v595
    %v692 = vunpack.c.l.b16 %v596
    %v693 = vunpack.c.l.b16 %v597
    %v694 = vunpack.c.l.b16 %v598
    %v695 = vunpack.c.l.b16 %v599
    %v696 = vunpack.c.l.b16 %v600
    %v697 = vunpack.c.l.b16 %v601
    %v698 = vunpack.c.l.b16 %v602
    %v699 = vunpack.c.l.b16 %v603
    %v700 = vunpack.c.l.b16 %v604
    %v701 = vunpack.c.l.b16 %v605
    %v702 = vunpack.c.l.b16 %v606
    %v703 = vunpack.c.l.b16 %v607
    %v704 = vunpack.c.l.b16 %v608
    %v705 = vunpack.c.l.b16 %v609
    %v706 = vunpack.c.l.b16 %v610
    %v707 = vunpack.c.l.b16 %v611
    %v708 = vunpack.c.l.b16 %v612
    %v709 = vunpack.c.l.b16 %v613
    %v710 = vunpack.c.l.b16 %v614
    %v711 = vunpack.c.l.b16 %v615
    %v712 = vunpack.c.l.b16 %v616
    %v713 = vunpack.c.l.b16 %v617
    %v714 = vunpack.c.l.b16 %v618
    %v715 = vpack.c.b16 %v668, %v667
    %v716 = vpack.c.b16 %v670, %v669
    %v717 = vpack.c.b16 %v672, %v671
    %v718 = vpack.c.b16 %v674, %v673
    %v719 = vpack.c.b16 %v676, %v675
    %v720 = vpack.c.b16 %v678, %v677
    %v721 = vpack.c.b16 %v680, %v679
    %v722 = vpack.c.b16 %v682, %v681
    %v723 = vpack.c.b16 %v684, %v683
    %v724 = vpack.c.b16 %v686, %v685
    %v725 = vpack.c.b16 %v688, %v687
    %v726 = vpack.c.b16 %v690, %v689
    %v727 = vpack.c.b16 %v692, %v691
    %v728 = vpack.c.b16 %v694, %v693
    %v729 = vpack.c.b16 %v696, %v695
    %v730 = vpack.c.b16 %v698, %v697
    %v731 = vpack.c.b16 %v700, %v699
    %v732 = vpack.c.b16 %v702, %v701
    %v733 = vpack.c.b16 %v704, %v703
    %v734 = vpack.c.b16 %v706, %v705
    %v735 = vpack.c.b16 %v708, %v707
    %v736 = vpack.c.b16 %v710, %v709
    %v737 = vpack.c.b16 %v712, %v711
    %v738 = vpack.c.b16 %v714, %v713
    %763 = vmatprep.subr.bf16.mxu0 0
    %764 = vmatpush1.bf16.msra.mxu0 %v722
    %765 = vmatprep.subr.bf16.mxu0 0
    %766 = vmatpush1.bf16.msra.mxu0 %v721
    %767 = vmatprep.subr.bf16.mxu0 0
    %768 = vmatpush1.bf16.msra.mxu0 %v720
    %769 = vmatprep.subr.bf16.mxu0 0
    %770 = vmatpush1.bf16.msra.mxu0 %v719
    %771 = vmatprep.subr.bf16.mxu0 0
    %772 = vmatpush1.bf16.msra.mxu0 %v718
    %773 = vmatprep.subr.bf16.mxu0 0
    %774 = vmatpush1.bf16.msra.mxu0 %v717
    %775 = vmatprep.subr.bf16.mxu0 0
    %776 = vmatpush1.bf16.msra.mxu0 %v716
    %777 = vmatprep.subr.bf16.mxu0 0
    %778 = vmatpush1.bf16.msra.mxu0 %v715
    %779 = vmatprep.subr.bf16.mxu0 0
    %780 = vmatpush2.bf16.msra.mxu0 %v730
    %781 = vmatprep.subr.bf16.mxu0 0
    %782 = vmatpush2.bf16.msra.mxu0 %v729
    %783 = vmatprep.subr.bf16.mxu0 0
    %784 = vmatpush2.bf16.msra.mxu0 %v728
    %785 = vmatprep.subr.bf16.mxu0 0
    %786 = vmatpush2.bf16.msra.mxu0 %v727
    %787 = vmatprep.subr.bf16.mxu0 0
    %788 = vmatpush2.bf16.msra.mxu0 %v726
    %789 = vmatprep.subr.bf16.mxu0 0
    %790 = vmatpush2.bf16.msra.mxu0 %v725
    %791 = vmatprep.subr.bf16.mxu0 0
    %792 = vmatpush2.bf16.msra.mxu0 %v724
    %793 = vmatprep.subr.bf16.mxu0 0
    %794 = vmatpush2.bf16.msra.mxu0 %v723
    %795 = vmatprep.mubr.bf16.mxu0 %v553
    %796 = vmatmul.mubr.bf16.gmra.mxu0 %v541
    %v797 = vpop.f32.mrf.mxu0
    %v798 = vadd.f32 0.0, %v797
    %v799 = vpop.f32.mrf.mxu0
    %v800 = vpop.f32.mrf.mxu0
    %v801 = vadd.f32 0.0, %v800
    %v802 = vpop.f32.mrf.mxu0
    %803 = vmatprep.mubr.bf16.mxu0 %v555
    %804 = vmatmul.mubr.bf16.gmra.mxu0 %v542
    %v805 = vpop.f32.mrf.mxu0
    %v806 = vadd.f32 0.0, %v805
    %v807 = vpop.f32.mrf.mxu0
    %v808 = vpop.f32.mrf.mxu0
    %v809 = vadd.f32 0.0, %v808
    %v810 = vpop.f32.mrf.mxu0
    %811 = vdwg.mxu0
    %812 = vmatprep.subr.bf16.mxu0 0
    %813 = vmatpush1.bf16.msra.mxu0 %v738
    %814 = vmatprep.subr.bf16.mxu0 0
    %815 = vmatpush1.bf16.msra.mxu0 %v737
    %816 = vmatprep.subr.bf16.mxu0 0
    %817 = vmatpush1.bf16.msra.mxu0 %v736
    %818 = vmatprep.subr.bf16.mxu0 0
    %819 = vmatpush1.bf16.msra.mxu0 %v735
    %820 = vmatprep.subr.bf16.mxu0 0
    %821 = vmatpush1.bf16.msra.mxu0 %v734
    %822 = vmatprep.subr.bf16.mxu0 0
    %823 = vmatpush1.bf16.msra.mxu0 %v733
    %824 = vmatprep.subr.bf16.mxu0 0
    %825 = vmatpush1.bf16.msra.mxu0 %v732
    %826 = vmatprep.subr.bf16.mxu0 0
    %827 = vmatpush1.bf16.msra.mxu0 %v731
    %828 = vmatprep.subr.bf16.mxu0 0
    %829 = vmatpush2.bf16.msra.mxu0 0
    %830 = vmatprep.subr.bf16.mxu0 0
    %831 = vmatpush2.bf16.msra.mxu0 0
    %832 = vmatprep.subr.bf16.mxu0 0
    %833 = vmatpush2.bf16.msra.mxu0 0
    %834 = vmatprep.subr.bf16.mxu0 0
    %835 = vmatpush2.bf16.msra.mxu0 0
    %836 = vmatprep.subr.bf16.mxu0 0
    %837 = vmatpush2.bf16.msra.mxu0 0
    %838 = vmatprep.subr.bf16.mxu0 0
    %839 = vmatpush2.bf16.msra.mxu0 0
    %840 = vmatprep.subr.bf16.mxu0 0
    %841 = vmatpush2.bf16.msra.mxu0 0
    %842 = vmatprep.subr.bf16.mxu0 0
    %843 = vmatpush2.bf16.msra.mxu0 0
    %844 = vmatprep.mubr.bf16.mxu0 0
    %845 = vmatmul.mubr.bf16.gmra.mxu0 %v566
    %v846 = vpop.f32.mrf.mxu0
    %v847 = vadd.f32 %v798, %v846
    %v848 = vpop.f32.mrf.mxu0
    %v849 = vpop.f32.mrf.mxu0
    %v850 = vadd.f32 %v801, %v849
    %v851 = vpop.f32.mrf.mxu0
    %852 = vmatprep.mubr.bf16.mxu0 0
    %853 = vmatmul.mubr.bf16.gmra.mxu0 %v568
    %v854 = vpop.f32.mrf.mxu0
    %v855 = vadd.f32 %v806, %v854
    %v856 = vpop.f32.mrf.mxu0
    %v857 = vpop.f32.mrf.mxu0
    %v858 = vadd.f32 %v809, %v857
    %v859 = vpop.f32.mrf.mxu0
    %860 = vdwg.mxu0
    %v861 = vld [vmem:[#allocation3] sm:$0xe]
    %v862 = vld [vmem:[#allocation3 + $0x4] sm:$0xf]
    %v863 = vld [vmem:[#allocation3 + $0x8] sm:$0xf]
    %v864 = vld [vmem:[#allocation3 + $0xc] sm:$0xf]
    %v865 = vld [vmem:[#allocation3 + $0x10] sm:$0x1]
    %v866 = vunpack.c.l.bf16 %v861
    %v867 = vunpack.c.l.bf16 %v862
    %v868 = vunpack.c.l.bf16 %v863
    %v869 = vunpack.c.l.bf16 %v864
    %v870 = vunpack.c.l.bf16 %v865
    %v871 = vld [vmem:[%s5] sm:$0x1]
    %v873 = vlaneseq
    %v874 = vshrl.u32 %v873, 7
    %v875 = vsub.s32 0, %v874
    %v876 = vrot.slane %v871, %v875
    %v878 = vmul.f32 %v847, %v876
    %v879 = vmul.f32 %v850, %v876
    %v880 = vmul.f32 %v855, %v876
    %v881 = vmul.f32 %v858, %v876
    %v882 = vld [vmem:[%s6] sm:$0x1]
    %v884 = vlaneseq
    %v885 = vshrl.u32 %v884, 7
    %v886 = vsub.s32 0, %v885
    %v887 = vrot.slane %v882, %v886
    %v889 = vadd.f32 %v878, %v887
    %v890 = vadd.f32 %v879, %v887
    %v891 = vadd.f32 %v880, %v887
    %v892 = vadd.f32 %v881, %v887
    %v893 = vmul.f32 %v889, %v455
    %v894 = vmul.f32 %v890, %v456
    %v895 = vmul.f32 %v891, %v457
    %v896 = vmul.f32 %v892, %v458
    %vm902 = vcmask 1045504
    %v903 = vrot.slane %v866, 2
    %v904 = vrot.slane %v867, 2
    %v905 = vsel %vm902, %v903, %v904
    %v906 = vrot.slane %v868, 2
    %v907 = vsel %vm902, %v904, %v906
    %v908 = vrot.slane %v869, 2
    %v909 = vsel %vm902, %v906, %v908
    %v910 = vrot.slane %v870, 2
    %v911 = vsel %vm902, %v908, %v910
    %v916 = vadd.f32 %v893, %v905
    %v917 = vadd.f32 %v894, %v907
    %v918 = vadd.f32 %v895, %v909
    %v919 = vadd.f32 %v896, %v911
    %v920 = vmax.f32 %v916, 0.0
    %v921 = vmax.f32 %v917, 0.0
    %v922 = vmax.f32 %v918, 0.0
    %v923 = vmax.f32 %v919, 0.0
    %924 = vst [vmem:[#allocation14] sm:$0xff] %v920
    %925 = vst [vmem:[#allocation14 + $0x8] sm:$0xff] %v921
    %926 = vst [vmem:[#allocation14 + $0x10] sm:$0xff] %v922
    %927 = vst [vmem:[#allocation14 + $0x18] sm:$0xff] %v923
    // Predicated region
    $region62: #{tpu_custom_call.1} parent=1 // pred_check
      _
    $region63: #{tpu_custom_call.1} parent=1 // pred_check_branch
      %929 = sbr.rel (0) target = $region65
    $region64: #{tpu_custom_call.1} parent=1 // pred_region
      %s931 = ssub.s32 512, 512
      %932 = vsyncadd [#allocation5], %s931
      %s933 = sshll.u32 [#allocation14], 4
      %s934 = int_to_ptr.vmem [resolvable:$true] %s933
      %939 = dma.vmem_to_hbm [thread:$0]  %s934, 512, %s8, [#allocation5], 128, 128, 8
    $region65: #{tpu_custom_call.1} parent=1 // pred_fallthru
      _
    // Predicated region
    $region66: #{tpu_custom_call.1} parent=1 // pred_check
      _
    $region67: #{tpu_custom_call.1} parent=1 // pred_check_branch
      %941 = sbr.rel (0) target = $region69
    $region68: #{tpu_custom_call.1} parent=1 // pred_region
      %942 = dma.done [#allocation5], 512
    $region69: #{tpu_custom_call.1} parent=1 // pred_fallthru
      _
    %943 = vsyncpa [#allocation4], 1
    %944 = vsyncpa [#allocation7], 1
    %945 = vsyncpa [#allocation10], 1
    %946 = vsyncpa [#allocation13], 1
    %947 = vsyncpa [#allocation5], 1

</llo_original>
